<compile_context>
chip_gen: v7x
topology: tpu7x:2x2x1
jax: 0.10.0
libtpu: 0.0.40
codegen_flags: <defaults>
</compile_context>

<pallas_src>
import functools

import jax
import jax.numpy as jnp
from jax import lax
from jax.experimental import pallas as pl
from jax.experimental.pallas import tpu as pltpu


_LANE_CHOICES = (1024, 512, 256, 128)   # preferred lane-dense trailing widths
_SMALL_SINGLE_BLOCK = 512 * 1024        # max elems/plane for one-block ragged path


def _relu2_kernel(xr_ref, xi_ref, yr_ref, yi_ref):
    # Pure VPU elementwise on the real and imaginary planes (mem-bound).
    yr_ref[...] = jnp.maximum(xr_ref[...], 0.0)
    yi_ref[...] = jnp.maximum(xi_ref[...], 0.0)


def _round_up(x: int, m: int) -> int:
    return (x + m - 1) // m * m


@functools.lru_cache(maxsize=None)
def _tiling_params():
    """Return (block_row_cap, vmem_limit_bytes) based on physical VMEM size."""
    vmem_cap = 64 * 1024 * 1024                 # conservative default: v7x
    try:
        info = pltpu.get_tpu_info()
        cap = getattr(info, "vmem_capacity_bytes", None)
        if cap:
            vmem_cap = int(cap)
    except Exception:
        pass
    if vmem_cap >= 100 * 1024 * 1024:
        # v5e / v6e (128 MiB physical): (1024,1024) f32 = 4 MiB/buffer,
        # 2-in/2-out double-buffered = 32 MiB resident.
        return 1024, 64 * 1024 * 1024
    # v7x (64 MiB physical): (512,1024) f32 = 2 MiB/buffer, 16 MiB resident.
    return 512, 32 * 1024 * 1024


def _relu_planes_2d(xr2d, xi2d, block_rows, vmem_limit):
    """Run the 2-in / 2-out ReLU kernel over lane-dense (rows, lanes) planes."""
    rows, lanes = xr2d.shape
    grid = (pl.cdiv(rows, block_rows),)         # last block may be partial
    spec = pl.BlockSpec((block_rows, lanes), lambda i: (i, 0))
    return pl.pallas_call(
        _relu2_kernel,
        out_shape=(jax.ShapeDtypeStruct((rows, lanes), jnp.float32),
                   jax.ShapeDtypeStruct((rows, lanes), jnp.float32)),
        grid=grid,
        in_specs=(spec, spec),
        out_specs=(spec, spec),
        # Planes are private temporaries: aliasing reuses their HBM buffers.
        input_output_aliases={0: 0, 1: 1},
        compiler_params=pltpu.CompilerParams(
            dimension_semantics=("parallel",),   # shard across v7x's 2 TCs
            vmem_limit_bytes=vmem_limit,
        ),
    )(xr2d, xi2d)


@jax.jit
def complex_relu(x: jax.Array) -> jax.Array:
    """ComplexRELU forward: relu(x.real) + 1j * relu(x.imag)."""
    assert x.dtype == jnp.complex64, "complex_relu expects complex64 input"

    xr = jnp.real(x)
    xi = jnp.imag(x)
    n = xr.size
    block_cap, vmem_limit = _tiling_params()

    # Largest lane width that divides the flat plane size -> no pad/slice.
    lanes = next((l for l in _LANE_CHOICES if n % l == 0), None)

    if lanes is not None:
        rows = n // lanes
        # Aim for >=2 grid steps (v7x megacore) while keeping the sublane dim
        # a multiple of 8 and respecting the per-generation VMEM cap.
        block_rows = min(block_cap, max(8, _round_up(pl.cdiv(rows, 2), 8)))
        if block_rows >= rows:
            block_rows = rows           # single full-extent block (tiny input)
        yr2d, yi2d = _relu_planes_2d(
            xr.reshape(rows, lanes), xi.reshape(rows, lanes),
            block_rows, vmem_limit)
        yr = yr2d.reshape(x.shape)
        yi = yi2d.reshape(x.shape)
    elif n <= _SMALL_SINGLE_BLOCK:
        # Ragged but small: one full-array block (exempt from the (8,128)
        # rule). Masked stores are fine at this size; still zero extra passes.
        yr2d, yi2d = _relu_planes_2d(
            xr.reshape(1, n), xi.reshape(1, n), 1, vmem_limit)
        yr = yr2d.reshape(x.shape)
        yi = yi2d.reshape(x.shape)
    else:
        # TODO(synk): large planes whose size has no multiple-of-128 factor
        # fall back to a single fused XLA elementwise pass (still mem-bound,
        # no pad/slice copies) instead of the Pallas kernel.
        yr = jnp.maximum(xr, 0.0)
        yi = jnp.maximum(xi, 0.0)

    return lax.complex(yr, yi)


if __name__ == "__main__":
    key = jax.random.PRNGKey(0)
    k_real, k_imag = jax.random.split(key)

    # Primary test: NCHW complex64 input, same as the PyTorch module.
    shape = (2, 4, 16, 16)
    xr = jax.random.normal(k_real, shape, dtype=jnp.float32)
    xi = jax.random.normal(k_imag, shape, dtype=jnp.float32)
    x = lax.complex(xr, xi)                     # complex64

    out = jax.block_until_ready(complex_relu(x))
    ref = lax.complex(jnp.maximum(xr, 0.0), jnp.maximum(xi, 0.0))
    assert out.shape == x.shape
    assert out.dtype == x.dtype
    assert jnp.allclose(out, ref), "mismatch vs reference (main shape)"

    # Secondary test: odd sizes exercise the ragged single-block path.
    shape2 = (2, 3, 5, 7)
    xr2 = jax.random.normal(k_real, shape2, dtype=jnp.float32)
    xi2 = jax.random.normal(k_imag, shape2, dtype=jnp.float32)
    x2 = lax.complex(xr2, xi2)
    out2 = jax.block_until_ready(complex_relu(x2))
    ref2 = lax.complex(jnp.maximum(xr2, 0.0), jnp.maximum(xi2, 0.0))
    assert jnp.allclose(out2, ref2), "mismatch vs reference (ragged shape)"

    # Tertiary test: multi-step grid with a partial final block
    # (rows=20, block_rows=16 -> grid=2, last block 4 rows).
    shape3 = (2, 10, 32, 32)
    xr3 = jax.random.normal(k_real, shape3, dtype=jnp.float32)
    xi3 = jax.random.normal(k_imag, shape3, dtype=jnp.float32)
    x3 = lax.complex(xr3, xi3)
    out3 = jax.block_until_ready(complex_relu(x3))
    ref3 = lax.complex(jnp.maximum(xr3, 0.0), jnp.maximum(xi3, 0.0))
    assert jnp.allclose(out3, ref3), "mismatch vs reference (multi-block shape)"

    print("KERNEL_OK")
</pallas_src>

<mosaic_0001>
module attributes {stable_mosaic.version = 11 : i64} {
  func.func @_relu2_kernel(%arg0: i32, %arg1: memref<2x1024xf32, #tpu.memory_space<vmem>>, %arg2: memref<2x1024xf32, #tpu.memory_space<vmem>>, %arg3: memref<2x1024xf32, #tpu.memory_space<vmem>>, %arg4: memref<2x1024xf32, #tpu.memory_space<vmem>>) attributes {dimension_semantics = [#tpu.dimension_semantics<parallel>], iteration_bounds = array<i64: 1>, scalar_prefetch = 0 : i64, scratch_operands = 0 : i64, tpu.core_type = #tpu.core_type<tc>, window_params = [{transform_indices = @transform_0, window_bounds = array<i64: 2, 1024>}, {transform_indices = @transform_1, window_bounds = array<i64: 2, 1024>}, {transform_indices = @transform_2, window_bounds = array<i64: 2, 1024>}, {transform_indices = @transform_3, window_bounds = array<i64: 2, 1024>}]} {
    %c0 = arith.constant 0 : index
    %c0_0 = arith.constant 0 : index
    %0 = vector.load %arg1[%c0, %c0_0] : memref<2x1024xf32, #tpu.memory_space<vmem>>, vector<2x1024xf32>
    %cst = arith.constant 0.000000e+00 : f32
    %1 = vector.broadcast %cst : f32 to vector<2x1024xf32>
    %2 = arith.maximumf %0, %1 : vector<2x1024xf32>
    %c0_1 = arith.constant 0 : index
    %c0_2 = arith.constant 0 : index
    %3 = vector.load %arg3[%c0_1, %c0_2] : memref<2x1024xf32, #tpu.memory_space<vmem>>, vector<2x1024xf32>
    tpu.vector_store %arg3[%c0_1, %c0_2], %2 {strides = array<i32>} : memref<2x1024xf32, #tpu.memory_space<vmem>>, vector<2x1024xf32>,
    %c0_3 = arith.constant 0 : index
    %c0_4 = arith.constant 0 : index
    %4 = vector.load %arg2[%c0_3, %c0_4] : memref<2x1024xf32, #tpu.memory_space<vmem>>, vector<2x1024xf32>
    %cst_5 = arith.constant 0.000000e+00 : f32
    %5 = vector.broadcast %cst_5 : f32 to vector<2x1024xf32>
    %6 = arith.maximumf %4, %5 : vector<2x1024xf32>
    %c0_6 = arith.constant 0 : index
    %c0_7 = arith.constant 0 : index
    %7 = vector.load %arg4[%c0_6, %c0_7] : memref<2x1024xf32, #tpu.memory_space<vmem>>, vector<2x1024xf32>
    tpu.vector_store %arg4[%c0_6, %c0_7], %6 {strides = array<i32>} : memref<2x1024xf32, #tpu.memory_space<vmem>>, vector<2x1024xf32>,
    return
  }
  func.func @transform_0(%arg0: i32) -> (i32, i32) {
    %c0_i32 = arith.constant 0 : i32
    %c0_i32_0 = arith.constant 0 : i32
    return %arg0, %c0_i32 : i32, i32
  }
  func.func @transform_1(%arg0: i32) -> (i32, i32) {
    %c0_i32 = arith.constant 0 : i32
    %c0_i32_0 = arith.constant 0 : i32
    return %arg0, %c0_i32 : i32, i32
  }
  func.func @transform_2(%arg0: i32) -> (i32, i32) {
    %c0_i32 = arith.constant 0 : i32
    %c0_i32_0 = arith.constant 0 : i32
    return %arg0, %c0_i32 : i32, i32
  }
  func.func @transform_3(%arg0: i32) -> (i32, i32) {
    %c0_i32 = arith.constant 0 : i32
    %c0_i32_0 = arith.constant 0 : i32
    return %arg0, %c0_i32 : i32, i32
  }
}

</mosaic_0001>

<llo_original>
// kernel: custom-call.1
$region0: #{custom-call.1}
  %s0 = inlined_call_operand.hbm [shape: c64[2,4,16,16], index: 0, kind: input, shape index: {}]
  %s1 = inlined_call_operand.vmem [shape: f32[2,4,16,16], index: 1, kind: output, shape index: {}]
  %s2 = scalar_lea.hbm %s0, 2048
  $region1: #{custom-call.1} parent=0
    #allocation0 [shape = 's32[1]{0}', space=sflag, size = 0x4, scoped, tag = 'scoped memory for custom-call.1']
    %3 = vsyncpa [#allocation0], 0
    %s4 = sshll.u32 %s1, 4
    %s5 = int_to_ptr.vmem [resolvable:$true] %s4
    %7 = dma.hbm_to_vmem [thread:$0]  %s2, 2048, %s5, [#allocation0]
    %8 = dma.done [#allocation0], 2048
    %9 = vsyncpa [#allocation0], 1

// kernel: custom-call
$region0: #{custom-call}
  %s0 = inlined_call_operand.hbm [shape: c64[2,4,16,16], index: 0, kind: input, shape index: {}]
  %s1 = inlined_call_operand.vmem [shape: f32[2,4,16,16], index: 1, kind: output, shape index: {}]
  $region1: #{custom-call} parent=0
    #allocation0 [shape = 's32[1]{0}', space=sflag, size = 0x4, scoped, tag = 'scoped memory for custom-call']
    %2 = vsyncpa [#allocation0], 0
    %s3 = sshll.u32 %s1, 4
    %s4 = int_to_ptr.vmem [resolvable:$true] %s3
    %6 = dma.hbm_to_vmem [thread:$0]  %s0, 2048, %s4, [#allocation0]
    %7 = dma.done [#allocation0], 2048
    %8 = vsyncpa [#allocation0], 1

// kernel: custom-call.2
$region0: #{custom-call.2}
  %s0 = inlined_call_operand.vmem [shape: f32[2,4,16,16], index: 0, kind: input, shape index: {}]
  %s1 = inlined_call_operand.vmem [shape: f32[2,4,16,16], index: 1, kind: input, shape index: {}]
  %s2 = inlined_call_operand.hbm [shape: c64[2,4,16,16], index: 2, kind: output, shape index: {}]
  %s3 = scalar_lea.hbm %s2, 2048
  $region1: #{custom-call.2} parent=0
    #allocation0 [shape = 's32[1]{0}', space=sflag, size = 0x4, scoped, tag = 'scoped memory for custom-call.2']
    %4 = vsyncpa [#allocation0], 0
    %s5 = sshll.u32 %s0, 4
    %s6 = int_to_ptr.vmem [resolvable:$true] %s5
    %8 = dma.vmem_to_hbm [thread:$0]  %s6, 2048, %s2, [#allocation0]
    %9 = dma.done [#allocation0], 2048
    %10 = vsyncpa [#allocation0], 1
  $region2: #{custom-call.2} parent=0
    #allocation1 [shape = 's32[1]{0}', space=sflag, size = 0x4, scoped, tag = 'scoped memory for custom-call.2']
    %11 = vsyncpa [#allocation1], 0
    %s12 = sshll.u32 %s1, 4
    %s13 = int_to_ptr.vmem [resolvable:$true] %s12
    %15 = dma.vmem_to_hbm [thread:$0]  %s13, 2048, %s3, [#allocation1]
    %16 = dma.done [#allocation1], 2048
    %17 = vsyncpa [#allocation1], 1

// kernel: complex_relu.1
$region0: #{complex_relu.1}
  #allocation0 [shape = 'u32[]', space=smem, size = 0x4, offset = 0x4, fixed_abs, tag = 'smem constant byte address 0x4 - core index']
  #allocation1 [shape = 'u32[144,128]{1,0:T(1,128)}', space=vmem, size = 0x12000, scoped, tag = 'internal scratch']
  %s0 = inlined_call_operand.vmem [shape: f32[2,1024], index: 0, kind: input, shape index: {}, may-alias: {0,2}]
  %s1 = inlined_call_operand.vmem [shape: f32[2,1024], index: 1, kind: input, shape index: {}, may-alias: {1,3}]
  %s2 = inlined_call_operand.vmem [shape: f32[2,1024], index: 2, kind: output, shape index: {0}, may-alias: {0,2}]
  %s3 = inlined_call_operand.vmem [shape: f32[2,1024], index: 3, kind: output, shape index: {1}, may-alias: {1,3}]
  %4 = xla_tuple %s2, %s3
  %s5 = sld [smem:[#allocation0]]
  $region26: #{complex_relu.1} parent=0
    _
  %s7 = ssub.s32 1, %s5
  %s8 = scalar_select 0, %s7, %s5
  // Predicated region
  $region2: #{complex_relu.1} parent=0 // pred_check
    _
  $region3: #{complex_relu.1} parent=0 // pred_check_branch
    %10 = sbr.rel (0) target = $region5
  $region4: #{complex_relu.1} parent=0 // pred_region
    _
  $region5: #{complex_relu.1} parent=0 // pred_fallthru
    _
  // Predicated region
  $region6: #{complex_relu.1} parent=0 // pred_check
    _
  $region7: #{complex_relu.1} parent=0 // pred_check_branch
    %12 = sbr.rel (0) target = $region9
  $region8: #{complex_relu.1} parent=0 // pred_region
    _
  $region9: #{complex_relu.1} parent=0 // pred_fallthru
    _
  %v13 = vld [vmem:[%s0] sm:$0xff]
  %v14 = vld [vmem:[%s0 + $0x8] sm:$0xff]
  %v15 = vmax.f32 %v13, 0.0
  %v16 = vmax.f32 %v14, 0.0
  %17 = vst [vmem:[%s2] sm:$0xff] %v15
  %18 = vst [vmem:[%s2 + $0x8] sm:$0xff] %v16
  %v19 = vld [vmem:[%s1] sm:$0xff]
  %v20 = vld [vmem:[%s1 + $0x8] sm:$0xff]
  %v21 = vmax.f32 %v19, 0.0
  %v22 = vmax.f32 %v20, 0.0
  %23 = vst [vmem:[%s3] sm:$0xff] %v21
  %24 = vst [vmem:[%s3 + $0x8] sm:$0xff] %v22
  // Predicated region
  $region10: #{complex_relu.1} parent=0 // pred_check
    _
  $region11: #{complex_relu.1} parent=0 // pred_check_branch
    %26 = sbr.rel (0) target = $region13
  $region12: #{complex_relu.1} parent=0 // pred_region
    _
  $region13: #{complex_relu.1} parent=0 // pred_fallthru
    _
  // Predicated region
  $region14: #{complex_relu.1} parent=0 // pred_check
    _
  $region15: #{complex_relu.1} parent=0 // pred_check_branch
    %28 = sbr.rel (0) target = $region17
  $region16: #{complex_relu.1} parent=0 // pred_region
    _
  $region17: #{complex_relu.1} parent=0 // pred_fallthru
    _
  // Predicated region
  $region18: #{complex_relu.1} parent=0 // pred_check
    _
  $region19: #{complex_relu.1} parent=0 // pred_check_branch
    %30 = sbr.rel (0) target = $region21
  $region20: #{complex_relu.1} parent=0 // pred_region
    _
  $region21: #{complex_relu.1} parent=0 // pred_fallthru
    _
  // Predicated region
  $region22: #{complex_relu.1} parent=0 // pred_check
    _
  $region23: #{complex_relu.1} parent=0 // pred_check_branch
    %32 = sbr.rel (0) target = $region25
  $region24: #{complex_relu.1} parent=0 // pred_region
    _
  $region25: #{complex_relu.1} parent=0 // pred_fallthru
    _

</llo_original>
